<compile_context>
chip_gen: v7x
topology: tpu7x:2x2x1
jax: 0.10.0
libtpu: 0.0.40
codegen_flags: <defaults>
</compile_context>

<pallas_src>
import jax
import jax.numpy as jnp
from jax import lax
from jax.experimental import pallas as pl
from jax.experimental.pallas import tpu as pltpu


# ---------------------------------------------------------------------------
# Small helpers
# ---------------------------------------------------------------------------

def _round_up(x, m):
    return ((x + m - 1) // m) * m


def _pad2(a, shape):
    return jnp.pad(a, ((0, shape[0] - a.shape[0]), (0, shape[1] - a.shape[1])))


def _pad1(a, n):
    return jnp.pad(a, (0, n - a.shape[0]))


def _vmem_budget(frac=0.75):
    """Generation-aware scoped-VMEM budget: ~75% of physical VMEM
    (~48 MiB on v7x, ~96 MiB on v5e/v6e); conservative fallback otherwise."""
    try:
        cap = int(pltpu.get_tpu_info().vmem_capacity_bytes)
    except Exception:
        cap = 64 * 1024 * 1024
    return int(frac * cap)


def _pick_tile(dim, target, mult):
    """Tile <= target (multiple of `mult`).  Prefer an exact divisor of `dim`
    when it is not pathologically small; otherwise pad `dim` to a tile
    multiple (padded rows/cols are sliced off by the caller)."""
    target = max(mult, (min(target, dim) // mult) * mult)
    t = target
    while dim % t:
        t -= mult
    if t >= max(mult, target // 2):
        return t, dim
    return target, _round_up(dim, target)


def _pick_time_block(S, target):
    """Timesteps per recurrence grid step: prefer an exact divisor of S (no
    wasted padded serial steps); otherwise pad S up to a multiple."""
    target = max(1, min(target, S))
    t = target
    while S % t:
        t -= 1
    if t >= max(1, target // 2):
        return t, S
    return target, _round_up(S, target)


# ---------------------------------------------------------------------------
# Parallel matmul + bias kernel (input projection and vocab projection)
# ---------------------------------------------------------------------------

def _matmul_bias_kernel(x_ref, w_ref, b_ref, o_ref):
    o_ref[...] = (jnp.dot(x_ref[...], w_ref[...],
                          preferred_element_type=jnp.float32)
                  + b_ref[...]).astype(o_ref.dtype)


def matmul_bias(x, w, b, *, out_dtype=jnp.float32, tile_m=512, tile_n=512):
    """(M,K) @ (K,N) + b -> (M,N) out_dtype.

    N is the OUTER grid axis so the weight column-tile is loaded once and
    stays resident while all M row-tiles stream past it (cheap weight reuse
    for the large vocab projection).  Caller guarantees M % 8 == 0 and
    N % 128 == 0; b has shape (1, N) float32.
    """
    M, K = x.shape
    _, N = w.shape
    tm, Mp = _pick_tile(M, tile_m, 8)
    tn, Np = _pick_tile(N, tile_n, 128)
    if Mp != M:
        x = jnp.pad(x, ((0, Mp - M), (0, 0)))
    if Np != N:
        w = jnp.pad(w, ((0, 0), (0, Np - N)))
        b = jnp.pad(b, ((0, 0), (0, Np - N)))

    xb, wb = x.dtype.itemsize, w.dtype.itemsize
    ob = jnp.dtype(out_dtype).itemsize
    need = 2 * (tm * K * xb + K * tn * wb + tn * 4 + tm * tn * ob)
    vmem_limit = int(min(max(2 * need, 32 * 1024 * 1024), _vmem_budget()))

    cost = pl.CostEstimate(
        flops=int(2 * Mp * K * Np),
        transcendentals=0,
        bytes_accessed=int(Mp * K * xb + K * Np * wb + Np * 4 + Mp * Np * ob),
    )

    grid_spec = pltpu.PrefetchScalarGridSpec(
        num_scalar_prefetch=0,
        grid=(Np // tn, Mp // tm),                         # N outer, M inner
        in_specs=[
            pl.BlockSpec((tm, K), lambda j, i: (i, 0)),    # activations stream
            pl.BlockSpec((K, tn), lambda j, i: (0, j)),    # weight (resident per j)
            pl.BlockSpec((1, tn), lambda j, i: (0, j)),    # bias (f32)
        ],
        out_specs=pl.BlockSpec((tm, tn), lambda j, i: (i, j)),
    )
    out = pl.pallas_call(
        _matmul_bias_kernel,
        out_shape=jax.ShapeDtypeStruct((Mp, Np), out_dtype),
        grid_spec=grid_spec,
        compiler_params=pltpu.CompilerParams(
            dimension_semantics=("parallel", "parallel"),
            vmem_limit_bytes=vmem_limit),
        cost_estimate=cost,
    )(x, w, b)
    if Mp != M or Np != N:
        out = out[:M, :N]
    return out


# ---------------------------------------------------------------------------
# Sequential recurrence kernel: h_t = tanh(xp_t + h_{t-1} @ w_hh)
# ---------------------------------------------------------------------------

def _rnn_recurrence(xp, h0, w_hh, *, time_block, batch_block):
    """Processes one (batch-block, time-chunk) per grid step.

    xp / h_seq are (Sp, Bp, Hp) in the io dtype (bf16 by default); the hidden
    state is carried across time chunks in an f32 VMEM scratch, so only the
    single dependent matmul h @ w_hh sits on the serial critical path.
    """
    Sp, Bp, Hp = xp.shape
    T, BT = time_block, batch_block
    nb, nt = Bp // BT, Sp // T
    io_dtype = xp.dtype
    io_b = jnp.dtype(io_dtype).itemsize
    w_b = jnp.dtype(w_hh.dtype).itemsize

    # Cap unrolling once chunks get large (vreg pressure / code bloat).
    unroll = T if T <= 8 else 4

    def kernel(h0_ref, xp_ref, whh_ref, hseq_ref, h_carry):
        @pl.when(pl.program_id(1) == 0)
        def _():
            h_carry[...] = h0_ref[...]

        w = whh_ref[...]                     # (Hp, Hp) matmul dtype, resident

        def step(i, h):
            h_new = jnp.tanh(
                xp_ref[i].astype(jnp.float32)                    # (BT, Hp)
                + jnp.dot(h.astype(w.dtype), w,
                          preferred_element_type=jnp.float32))
            hseq_ref[i] = h_new.astype(hseq_ref.dtype)
            return h_new

        h_carry[...] = lax.fori_loop(0, T, step, h_carry[...], unroll=unroll)

    need = (2 * 2 * T * BT * Hp * io_b      # xp in + h_seq out, double-buffered
            + 2 * Hp * Hp * w_b             # resident w_hh (double-buffered)
            + 2 * BT * Hp * 4               # h0
            + BT * Hp * 4)                  # f32 carry scratch
    vmem_limit = int(min(max(2 * need, 32 * 1024 * 1024), _vmem_budget()))

    cost = pl.CostEstimate(
        flops=int(2 * Sp * Bp * Hp * Hp + 2 * Sp * Bp * Hp),
        transcendentals=int(Sp * Bp * Hp),
        bytes_accessed=int(2 * Sp * Bp * Hp * io_b + Hp * Hp * w_b
                           + Bp * Hp * 4),
    )

    grid_spec = pltpu.PrefetchScalarGridSpec(
        num_scalar_prefetch=0,
        grid=(nb, nt),                                          # batch, time
        in_specs=[
            pl.BlockSpec((BT, Hp), lambda b, t: (b, 0)),        # h0 block
            pl.BlockSpec((T, BT, Hp), lambda b, t: (t, b, 0)),  # xp time chunk
            # TODO(synk): pipeline_mode=pl.Buffered(1) on w_hh / h0 (grid-
            # invariant) would reclaim one buffer copy each on v7x.
            pl.BlockSpec((Hp, Hp), lambda b, t: (0, 0)),        # w_hh resident
        ],
        out_specs=pl.BlockSpec((T, BT, Hp), lambda b, t: (t, b, 0)),
        scratch_shapes=[pltpu.VMEM((BT, Hp), jnp.float32)],
    )

    return pl.pallas_call(
        kernel,
        out_shape=jax.ShapeDtypeStruct((Sp, Bp, Hp), io_dtype),
        grid_spec=grid_spec,
        compiler_params=pltpu.CompilerParams(
            # batch blocks independent (megacore / v7x 2-TC); time sequential
            dimension_semantics=("parallel", "arbitrary"),
            vmem_limit_bytes=vmem_limit),
        cost_estimate=cost,
    )(h0, xp, w_hh)


# ---------------------------------------------------------------------------
# Full forward pass
# ---------------------------------------------------------------------------

def basic_rnn_forward(x_tokens, h0, params, *, matmul_dtype=jnp.bfloat16,
                      io_dtype=jnp.bfloat16, logits_dtype=jnp.float32,
                      time_block=32, batch_block=256):
    """x_tokens: (B, S) int32; h0: (B, H) f32 -> (logits (B,S,V), h (B,H))."""
    emb = params["embedding"]
    w_ih, w_hh, b_h = params["w_ih"], params["w_hh"], params["b_h"]
    w_ho, b_o = params["w_ho"], params["b_o"]

    B, S = x_tokens.shape
    H = w_ih.shape[0]
    V = w_ho.shape[1]

    LANE, SUB = 128, 8
    Hp = _round_up(H, LANE)
    Vp = _round_up(V, LANE)

    # Recurrence batch block: as large as possible so each serial dot feeds
    # many MXU rows (whole padded batch when it fits under `batch_block`).
    Bp8 = _round_up(B, SUB)
    if Bp8 <= batch_block:
        BT, Bp = Bp8, Bp8
    else:
        BT = _round_up(batch_block, SUB)
        Bp = _round_up(B, BT)
    # TODO(synk): on v7x (2 TCs) split BT = Bp // 2 when Bp >= 16 so the
    # "parallel" batch axis has >= 2 blocks for the second core.

    io_b = jnp.dtype(io_dtype).itemsize
    w_b = jnp.dtype(matmul_dtype).itemsize

    # Recurrence time chunk: as many steps per grid step as the VMEM budget
    # allows, preferring an exact divisor of S (no padded serial work).
    budget = _vmem_budget()
    fixed = 2 * Hp * Hp * w_b + 3 * BT * Hp * 4
    per_t = 2 * 2 * BT * Hp * io_b            # xp + h_seq, double-buffered
    t_cap = max(1, (budget // 2 - fixed) // per_t)
    T, Sp = _pick_time_block(S, min(time_block, t_cap))

    f32 = jnp.float32
    # Zero-padded parameters.  Zero-padded *hidden* lanes stay exactly 0
    # through the recurrence (tanh(0) == 0) so they never contaminate real
    # lanes; padded batch rows / vocab cols / timesteps are sliced off.
    emb_p = _pad2(emb, (emb.shape[0], Hp)).astype(matmul_dtype)
    wih_p = _pad2(w_ih, (Hp, Hp)).astype(matmul_dtype)
    whh_p = _pad2(w_hh, (Hp, Hp)).astype(matmul_dtype)
    who_p = _pad2(w_ho, (Hp, Vp)).astype(matmul_dtype)
    bh_p = _pad1(b_h, Hp).reshape(1, Hp).astype(f32)
    bo_p = _pad1(b_o, Vp).reshape(1, Vp).astype(f32)

    # Embedding gather straight from the matmul-dtype table in time-major
    # (Sp, Bp, Hp) layout (transpose the tiny token matrix, not activations);
    # tokens padded up front so xp needs no post-pad pass.
    # TODO(synk): the gather itself stays in XLA (jnp.take).
    tok_p = jnp.pad(x_tokens, ((0, Bp - B), (0, Sp - S)))
    x_emb = jnp.take(emb_p, tok_p.T, axis=0)                   # (Sp, Bp, Hp)

    # Time-parallel input projection + b_h as one big MXU matmul -> io dtype.
    xp = matmul_bias(x_emb.reshape(Sp * Bp, Hp), wih_p, bh_p,
                     out_dtype=io_dtype).reshape(Sp, Bp, Hp)

    h0_p = jnp.pad(h0.astype(f32), ((0, Bp - B), (0, Hp - H)))

    # Sequential recurrence (only h @ w_hh on the serial critical path).
    h_seq = _rnn_recurrence(xp, h0_p, whh_p, time_block=T, batch_block=BT)

    # Batch-major relayout of the small io-dtype h_seq so the vocab matmul
    # emits logits already in (B, S, V) order (no (S,B,V) f32 transpose).
    h_bm = jnp.transpose(h_seq, (1, 0, 2)).reshape(Bp * Sp, Hp)

    # Time-parallel vocab projection as one big MXU matmul (w_ho resident).
    logits = matmul_bias(h_bm, who_p, bo_p, out_dtype=logits_dtype)
    logits = logits.reshape(Bp, Sp, Vp)[:B, :S, :V]

    h_last = h_seq[S - 1, :B, :H].astype(f32)
    return logits, h_last


# ---------------------------------------------------------------------------
# Params / reference
# ---------------------------------------------------------------------------

def xavier_uniform(key, shape, dtype=jnp.float32):
    fan_in, fan_out = shape[0], shape[1]
    limit = jnp.sqrt(6.0 / (fan_in + fan_out))
    return jax.random.uniform(key, shape, dtype, minval=-limit, maxval=limit)


def init_params(key, vocab_size, hidden_size):
    k_emb, k_ih, k_hh, k_ho = jax.random.split(key, 4)
    return {
        "embedding": jax.random.normal(k_emb, (vocab_size, hidden_size),
                                       jnp.float32),
        "w_ih": xavier_uniform(k_ih, (hidden_size, hidden_size)),
        "w_hh": xavier_uniform(k_hh, (hidden_size, hidden_size)),
        "b_h": jnp.zeros((hidden_size,), jnp.float32),
        "w_ho": xavier_uniform(k_ho, (hidden_size, vocab_size)),
        "b_o": jnp.zeros((vocab_size,), jnp.float32),
    }


def reference_forward(x_tokens, h0, params):
    """Pure-JAX f32 reference mirroring the PyTorch loop."""
    x_emb = jnp.take(params["embedding"], x_tokens, axis=0)     # (B, S, H)
    h = h0
    outs = []
    for j in range(x_tokens.shape[1]):
        x_t = x_emb[:, j, :]
        h = jnp.tanh(x_t @ params["w_ih"] + h @ params["w_hh"] + params["b_h"])
        outs.append(h @ params["w_ho"] + params["b_o"])
    return jnp.stack(outs, axis=1), h


# ---------------------------------------------------------------------------
# Demo / self-check
# ---------------------------------------------------------------------------

if __name__ == "__main__":
    B, S, H, V = 2, 16, 32, 16
    key = jax.random.PRNGKey(0)
    k_params, k_tok = jax.random.split(key)

    params = init_params(k_params, vocab_size=V, hidden_size=H)
    x_tokens = jax.random.randint(k_tok, (B, S), 0, V, dtype=jnp.int32)
    h0 = jnp.zeros((B, H), jnp.float32)   # initialize_hidden

    ref_logits, ref_h = reference_forward(x_tokens, h0, params)

    # 1) f32 path with a small time_block -> exercises the multi-chunk f32
    #    VMEM carry across recurrence grid steps.  Tight tolerance.
    logits, h_last = jax.block_until_ready(
        basic_rnn_forward(x_tokens, h0, params,
                          matmul_dtype=jnp.float32, io_dtype=jnp.float32,
                          time_block=8))
    assert logits.shape == (B, S, V) and h_last.shape == (B, H)
    assert jnp.allclose(logits, ref_logits, atol=1e-3, rtol=1e-3)
    assert jnp.allclose(h_last, ref_h, atol=1e-3, rtol=1e-3)

    # 2) Default perf path: bf16 matmul operands / intermediates, f32
    #    accumulation and f32 hidden carry.  Loose sanity tolerance.
    logits_bf, h_bf = jax.block_until_ready(
        basic_rnn_forward(x_tokens, h0, params))
    assert logits_bf.shape == (B, S, V) and h_bf.shape == (B, H)
    assert jnp.allclose(logits_bf, ref_logits, atol=2e-1, rtol=2e-1)
    assert jnp.allclose(h_bf, ref_h, atol=2e-1, rtol=2e-1)

    print("KERNEL_OK")
</pallas_src>

<mosaic_0001>
module attributes {stable_mosaic.version = 11 : i64} {
  func.func @_matmul_bias_kernel(%arg0: i32, %arg1: i32, %arg2: memref<128x128xf32, #tpu.memory_space<vmem>>, %arg3: memref<128x128xf32, #tpu.memory_space<vmem>>, %arg4: memref<1x128xf32, #tpu.memory_space<vmem>>, %arg5: memref<128x128xf32, #tpu.memory_space<vmem>>) attributes {dimension_semantics = [#tpu.dimension_semantics<parallel>, #tpu.dimension_semantics<parallel>], iteration_bounds = array<i64: 1, 1>, scalar_prefetch = 0 : i64, scratch_operands = 0 : i64, tpu.core_type = #tpu.core_type<tc>, window_params = [{transform_indices = @transform_0, window_bounds = array<i64: 128, 128>}, {transform_indices = @transform_1, window_bounds = array<i64: 128, 128>}, {transform_indices = @transform_2, window_bounds = array<i64: 1, 128>}, {transform_indices = @transform_3, window_bounds = array<i64: 128, 128>}]} {
    %c0 = arith.constant 0 : index
    %c0_0 = arith.constant 0 : index
    %0 = vector.load %arg2[%c0, %c0_0] : memref<128x128xf32, #tpu.memory_space<vmem>>, vector<128x128xf32>
    %c0_1 = arith.constant 0 : index
    %c0_2 = arith.constant 0 : index
    %1 = vector.load %arg3[%c0_1, %c0_2] : memref<128x128xf32, #tpu.memory_space<vmem>>, vector<128x128xf32>
    %cst = arith.constant dense<0.000000e+00> : vector<128x128xf32>
    %2 = tpu.matmul %0, %1, %cst {dimension_numbers = #tpu.dot_dimension_numbers<[1], [0], [0], [1], [0, 0, 1, 1], [], []>} : vector<128x128xf32>, vector<128x128xf32>, vector<128x128xf32> -> vector<128x128xf32>
    %c0_3 = arith.constant 0 : index
    %c0_4 = arith.constant 0 : index
    %3 = vector.load %arg4[%c0_3, %c0_4] : memref<1x128xf32, #tpu.memory_space<vmem>>, vector<1x128xf32>
    %4 = vector.broadcast %3 : vector<1x128xf32> to vector<128x128xf32>
    %5 = arith.addf %2, %4 : vector<128x128xf32>
    %c0_5 = arith.constant 0 : index
    %c0_6 = arith.constant 0 : index
    %6 = vector.load %arg5[%c0_5, %c0_6] : memref<128x128xf32, #tpu.memory_space<vmem>>, vector<128x128xf32>
    tpu.vector_store %arg5[%c0_5, %c0_6], %5 {strides = array<i32>} : memref<128x128xf32, #tpu.memory_space<vmem>>, vector<128x128xf32>,
    return
  }
  func.func @transform_0(%arg0: i32, %arg1: i32) -> (i32, i32) {
    %c0_i32 = arith.constant 0 : i32
    %c0_i32_0 = arith.constant 0 : i32
    return %arg1, %c0_i32 : i32, i32
  }
  func.func @transform_1(%arg0: i32, %arg1: i32) -> (i32, i32) {
    %c0_i32 = arith.constant 0 : i32
    %c0_i32_0 = arith.constant 0 : i32
    return %c0_i32, %arg0 : i32, i32
  }
  func.func @transform_2(%arg0: i32, %arg1: i32) -> (i32, i32) {
    %c0_i32 = arith.constant 0 : i32
    %c0_i32_0 = arith.constant 0 : i32
    return %c0_i32, %arg0 : i32, i32
  }
  func.func @transform_3(%arg0: i32, %arg1: i32) -> (i32, i32) {
    %c0_i32 = arith.constant 0 : i32
    return %arg1, %arg0 : i32, i32
  }
}

</mosaic_0001>

<llo_original>
// kernel: tpu_custom_call.1
$region0: #{tpu_custom_call.1}
  #allocation0 [shape = 'u32[]', space=smem, size = 0x4, offset = 0x4, fixed_abs, tag = 'smem constant byte address 0x4 - core index']
  #allocation1 [shape = 'u32[144,128]{1,0:T(1,128)}', space=vmem, size = 0x12000, scoped, tag = 'internal scratch']
  %s0 = inlined_call_operand.hbm [shape: f32[128,128], index: 0, kind: input, shape index: {}]
  %s1 = inlined_call_operand.hbm [shape: f32[128,128], index: 1, kind: input, shape index: {}]
  %s2 = inlined_call_operand.vmem [shape: f32[1,128], index: 2, kind: input, shape index: {}]
  %s3 = inlined_call_operand.hbm [shape: f32[128,128], index: 3, kind: output, shape index: {}]
  %s4 = sld [smem:[#allocation0]]
  $region30: #{tpu_custom_call.1} parent=0
    _
  %s6 = ssub.s32 1, %s4
  %s7 = scalar_select 0, %s6, %s4
  $region1: #{tpu_custom_call.1} parent=0
    #allocation2 [shape = 'u8[65536]{0}', space=vmem, size = 0x10000, scoped, tag = 'input window, operand 0, single buffered']
    #allocation3 [shape = 's32[1]{0}', space=sflag, size = 0x4, scoped, tag = 'scoped memory for tpu_custom_call.1']
    #allocation4 [shape = 's32[1]{0}', space=sflag, size = 0x4, scoped, tag = 'scoped memory for tpu_custom_call.1']
    #allocation5 [shape = 'u8[65536]{0}', space=vmem, size = 0x10000, scoped, tag = 'input window, operand 1, single buffered']
    #allocation6 [shape = 's32[1]{0}', space=sflag, size = 0x4, scoped, tag = 'scoped memory for tpu_custom_call.1']
    #allocation7 [shape = 'u8[65536]{0}', space=vmem, size = 0x10000, scoped, tag = 'output window, operand 0, single buffered']
    %8 = vsyncpa [#allocation3], 0
    %9 = vsyncpa [#allocation6], 0
    %10 = vsyncpa [#allocation4], 0
    // Predicated region
    $region2: #{tpu_custom_call.1} parent=1 // pred_check
      _
    $region3: #{tpu_custom_call.1} parent=1 // pred_check_branch
      %12 = sbr.rel (0) target = $region5
    $region4: #{tpu_custom_call.1} parent=1 // pred_region
      %s14 = ssub.s32 2048, 2048
      %15 = vsyncadd [#allocation3], %s14
      %s16 = sshll.u32 [#allocation2], 4
      %s17 = int_to_ptr.vmem [resolvable:$true] %s16
      %22 = dma.hbm_to_vmem [thread:$0]  %s0, 2048, %s17, [#allocation3], 128, 128, 8
    $region5: #{tpu_custom_call.1} parent=1 // pred_fallthru
      _
    // Predicated region
    $region6: #{tpu_custom_call.1} parent=1 // pred_check
      _
    $region7: #{tpu_custom_call.1} parent=1 // pred_check_branch
      %24 = sbr.rel (0) target = $region9
    $region8: #{tpu_custom_call.1} parent=1 // pred_region
      %s26 = ssub.s32 2048, 2048
      %27 = vsyncadd [#allocation6], %s26
      %s28 = sshll.u32 [#allocation5], 4
      %s29 = int_to_ptr.vmem [resolvable:$true] %s28
      %34 = dma.hbm_to_vmem [thread:$0]  %s1, 2048, %s29, [#allocation6], 128, 128, 8
    $region9: #{tpu_custom_call.1} parent=1 // pred_fallthru
      _
    // Predicated region
    $region10: #{tpu_custom_call.1} parent=1 // pred_check
      _
    $region11: #{tpu_custom_call.1} parent=1 // pred_check_branch
      %36 = sbr.rel (0) target = $region13
    $region12: #{tpu_custom_call.1} parent=1 // pred_region
      _
    $region13: #{tpu_custom_call.1} parent=1 // pred_fallthru
      _
    // Predicated region
    $region14: #{tpu_custom_call.1} parent=1 // pred_check
      _
    $region15: #{tpu_custom_call.1} parent=1 // pred_check_branch
      %38 = sbr.rel (0) target = $region17
    $region16: #{tpu_custom_call.1} parent=1 // pred_region
      %39 = dma.done [#allocation3], 2048
    $region17: #{tpu_custom_call.1} parent=1 // pred_fallthru
      _
    // Predicated region
    $region18: #{tpu_custom_call.1} parent=1 // pred_check
      _
    $region19: #{tpu_custom_call.1} parent=1 // pred_check_branch
      %41 = sbr.rel (0) target = $region21
    $region20: #{tpu_custom_call.1} parent=1 // pred_region
      %42 = dma.done [#allocation6], 2048
    $region21: #{tpu_custom_call.1} parent=1 // pred_fallthru
      _
    %v43 = vld [vmem:[#allocation2] sm:$0xff]
    %v44 = vld [vmem:[#allocation2 + $0x8] sm:$0xff]
    %v45 = vld [vmem:[#allocation2 + $0x10] sm:$0xff]
    %v46 = vld [vmem:[#allocation2 + $0x18] sm:$0xff]
    %v47 = vld [vmem:[#allocation2 + $0x20] sm:$0xff]
    %v48 = vld [vmem:[#allocation2 + $0x28] sm:$0xff]
    %v49 = vld [vmem:[#allocation2 + $0x30] sm:$0xff]
    %v50 = vld [vmem:[#allocation2 + $0x38] sm:$0xff]
    %v51 = vld [vmem:[#allocation2 + $0x40] sm:$0xff]
    %v52 = vld [vmem:[#allocation2 + $0x48] sm:$0xff]
    %v53 = vld [vmem:[#allocation2 + $0x50] sm:$0xff]
    %v54 = vld [vmem:[#allocation2 + $0x58] sm:$0xff]
    %v55 = vld [vmem:[#allocation2 + $0x60] sm:$0xff]
    %v56 = vld [vmem:[#allocation2 + $0x68] sm:$0xff]
    %v57 = vld [vmem:[#allocation2 + $0x70] sm:$0xff]
    %v58 = vld [vmem:[#allocation2 + $0x78] sm:$0xff]
    %v59 = vld [vmem:[#allocation5] sm:$0xff]
    %v60 = vld [vmem:[#allocation5 + $0x8] sm:$0xff]
    %v61 = vld [vmem:[#allocation5 + $0x10] sm:$0xff]
    %v62 = vld [vmem:[#allocation5 + $0x18] sm:$0xff]
    %v63 = vld [vmem:[#allocation5 + $0x20] sm:$0xff]
    %v64 = vld [vmem:[#allocation5 + $0x28] sm:$0xff]
    %v65 = vld [vmem:[#allocation5 + $0x30] sm:$0xff]
    %v66 = vld [vmem:[#allocation5 + $0x38] sm:$0xff]
    %v67 = vld [vmem:[#allocation5 + $0x40] sm:$0xff]
    %v68 = vld [vmem:[#allocation5 + $0x48] sm:$0xff]
    %v69 = vld [vmem:[#allocation5 + $0x50] sm:$0xff]
    %v70 = vld [vmem:[#allocation5 + $0x58] sm:$0xff]
    %v71 = vld [vmem:[#allocation5 + $0x60] sm:$0xff]
    %v72 = vld [vmem:[#allocation5 + $0x68] sm:$0xff]
    %v73 = vld [vmem:[#allocation5 + $0x70] sm:$0xff]
    %v74 = vld [vmem:[#allocation5 + $0x78] sm:$0xff]
    %v75 = vld [vmem:[%s2] sm:$0x1]
    %v77 = vlaneseq
    %v78 = vshrl.u32 %v77, 7
    %v79 = vsub.s32 0, %v78
    %v80 = vrot.slane %v75, %v79
    %82 = vmatprep.subr.mxu0 0.0
    %83 = vmatpush1.msra.mxu0 %v59
    %84 = vmatprep.subr.mxu0 0.0
    %85 = vmatpush1.msra.mxu0 %v60
    %86 = vmatprep.subr.mxu0 0.0
    %87 = vmatpush1.msra.mxu0 %v61
    %88 = vmatprep.subr.mxu0 0.0
    %89 = vmatpush1.msra.mxu0 %v62
    %90 = vmatprep.subr.mxu0 0.0
    %91 = vmatpush1.msra.mxu0 %v63
    %92 = vmatprep.subr.mxu0 0.0
    %93 = vmatpush1.msra.mxu0 %v64
    %94 = vmatprep.subr.mxu0 0.0
    %95 = vmatpush1.msra.mxu0 %v65
    %96 = vmatprep.subr.mxu0 0.0
    %97 = vmatpush1.msra.mxu0 %v66
    %98 = vmatprep.subr.mxu0 0.0
    %99 = vmatpush1.msra.mxu0 %v67
    %100 = vmatprep.subr.mxu0 0.0
    %101 = vmatpush1.msra.mxu0 %v68
    %102 = vmatprep.subr.mxu0 0.0
    %103 = vmatpush1.msra.mxu0 %v69
    %104 = vmatprep.subr.mxu0 0.0
    %105 = vmatpush1.msra.mxu0 %v70
    %106 = vmatprep.subr.mxu0 0.0
    %107 = vmatpush1.msra.mxu0 %v71
    %108 = vmatprep.subr.mxu0 0.0
    %109 = vmatpush1.msra.mxu0 %v72
    %110 = vmatprep.subr.mxu0 0.0
    %111 = vmatpush1.msra.mxu0 %v73
    %112 = vmatprep.subr.mxu0 0.0
    %113 = vmatpush1.msra.mxu0 %v74
    %114 = vmatprep.subr.mxu0 0.0
    %115 = vmatpush1.msra.mxu0 0.0
    %116 = vmatprep.subr.mxu0 0.0
    %117 = vmatpush1.msra.mxu0 0.0
    %118 = vmatprep.subr.mxu0 0.0
    %119 = vmatpush1.msra.mxu0 0.0
    %120 = vmatprep.subr.mxu0 0.0
    %121 = vmatpush1.msra.mxu0 0.0
    %122 = vmatprep.subr.mxu0 0.0
    %123 = vmatpush1.msra.mxu0 0.0
    %124 = vmatprep.subr.mxu0 0.0
    %125 = vmatpush1.msra.mxu0 0.0
    %126 = vmatprep.subr.mxu0 0.0
    %127 = vmatpush1.msra.mxu0 0.0
    %128 = vmatprep.subr.mxu0 0.0
    %129 = vmatpush1.msra.mxu0 0.0
    %130 = vmatprep.subr.mxu0 0.0
    %131 = vmatpush1.msra.mxu0 0.0
    %132 = vmatprep.subr.mxu0 0.0
    %133 = vmatpush1.msra.mxu0 0.0
    %134 = vmatprep.subr.mxu0 0.0
    %135 = vmatpush1.msra.mxu0 0.0
    %136 = vmatprep.subr.mxu0 0.0
    %137 = vmatpush1.msra.mxu0 0.0
    %138 = vmatprep.subr.mxu0 0.0
    %139 = vmatpush1.msra.mxu0 0.0
    %140 = vmatprep.subr.mxu0 0.0
    %141 = vmatpush1.msra.mxu0 0.0
    %142 = vmatprep.subr.mxu0 0.0
    %143 = vmatpush1.msra.mxu0 0.0
    %144 = vmatprep.subr.mxu0 0.0
    %145 = vmatpush1.msra.mxu0 0.0
    %146 = vmatprep.mubr.f32.mxu0 0.0
    %147 = vmatmul.mubr.f32.gmra.mrb[0].mxu0 %v43
    %v148 = vpop.f32.mrb[0].mxu0
    %v149 = vadd.f32 %v80, %v148
    %v150 = vpop.f32.mrb[0].mxu0
    %151 = vmatprep.mubr.f32.mxu0 0.0
    %152 = vmatmul.mubr.f32.gmra.mrb[0].mxu0 %v44
    %v153 = vpop.f32.mrb[0].mxu0
    %v154 = vadd.f32 %v80, %v153
    %v155 = vpop.f32.mrb[0].mxu0
    %156 = vmatprep.mubr.f32.mxu0 0.0
    %157 = vmatmul.mubr.f32.gmra.mrb[0].mxu0 %v45
    %v158 = vpop.f32.mrb[0].mxu0
    %v159 = vadd.f32 %v80, %v158
    %v160 = vpop.f32.mrb[0].mxu0
    %161 = vmatprep.mubr.f32.mxu0 0.0
    %162 = vmatmul.mubr.f32.gmra.mrb[0].mxu0 %v46
    %v163 = vpop.f32.mrb[0].mxu0
    %v164 = vadd.f32 %v80, %v163
    %v165 = vpop.f32.mrb[0].mxu0
    %166 = vmatprep.mubr.f32.mxu0 0.0
    %167 = vmatmul.mubr.f32.gmra.mrb[0].mxu0 %v47
    %v168 = vpop.f32.mrb[0].mxu0
    %v169 = vadd.f32 %v80, %v168
    %v170 = vpop.f32.mrb[0].mxu0
    %171 = vmatprep.mubr.f32.mxu0 0.0
    %172 = vmatmul.mubr.f32.gmra.mrb[0].mxu0 %v48
    %v173 = vpop.f32.mrb[0].mxu0
    %v174 = vadd.f32 %v80, %v173
    %v175 = vpop.f32.mrb[0].mxu0
    %176 = vmatprep.mubr.f32.mxu0 0.0
    %177 = vmatmul.mubr.f32.gmra.mrb[0].mxu0 %v49
    %v178 = vpop.f32.mrb[0].mxu0
    %v179 = vadd.f32 %v80, %v178
    %v180 = vpop.f32.mrb[0].mxu0
    %181 = vmatprep.mubr.f32.mxu0 0.0
    %182 = vmatmul.mubr.f32.gmra.mrb[0].mxu0 %v50
    %v183 = vpop.f32.mrb[0].mxu0
    %v184 = vadd.f32 %v80, %v183
    %v185 = vpop.f32.mrb[0].mxu0
    %186 = vmatprep.mubr.f32.mxu0 0.0
    %187 = vmatmul.mubr.f32.gmra.mrb[0].mxu0 %v51
    %v188 = vpop.f32.mrb[0].mxu0
    %v189 = vadd.f32 %v80, %v188
    %v190 = vpop.f32.mrb[0].mxu0
    %191 = vmatprep.mubr.f32.mxu0 0.0
    %192 = vmatmul.mubr.f32.gmra.mrb[0].mxu0 %v52
    %v193 = vpop.f32.mrb[0].mxu0
    %v194 = vadd.f32 %v80, %v193
    %v195 = vpop.f32.mrb[0].mxu0
    %196 = vmatprep.mubr.f32.mxu0 0.0
    %197 = vmatmul.mubr.f32.gmra.mrb[0].mxu0 %v53
    %v198 = vpop.f32.mrb[0].mxu0
    %v199 = vadd.f32 %v80, %v198
    %v200 = vpop.f32.mrb[0].mxu0
    %201 = vmatprep.mubr.f32.mxu0 0.0
    %202 = vmatmul.mubr.f32.gmra.mrb[0].mxu0 %v54
    %v203 = vpop.f32.mrb[0].mxu0
    %v204 = vadd.f32 %v80, %v203
    %v205 = vpop.f32.mrb[0].mxu0
    %206 = vmatprep.mubr.f32.mxu0 0.0
    %207 = vmatmul.mubr.f32.gmra.mrb[0].mxu0 %v55
    %v208 = vpop.f32.mrb[0].mxu0
    %v209 = vadd.f32 %v80, %v208
    %v210 = vpop.f32.mrb[0].mxu0
    %211 = vmatprep.mubr.f32.mxu0 0.0
    %212 = vmatmul.mubr.f32.gmra.mrb[0].mxu0 %v56
    %v213 = vpop.f32.mrb[0].mxu0
    %v214 = vadd.f32 %v80, %v213
    %v215 = vpop.f32.mrb[0].mxu0
    %216 = vmatprep.mubr.f32.mxu0 0.0
    %217 = vmatmul.mubr.f32.gmra.mrb[0].mxu0 %v57
    %v218 = vpop.f32.mrb[0].mxu0
    %v219 = vadd.f32 %v80, %v218
    %v220 = vpop.f32.mrb[0].mxu0
    %221 = vmatprep.mubr.f32.mxu0 0.0
    %222 = vmatmul.mubr.f32.gmra.mrb[0].mxu0 %v58
    %v223 = vpop.f32.mrb[0].mxu0
    %v224 = vadd.f32 %v80, %v223
    %v225 = vpop.f32.mrb[0].mxu0
    %226 = vdwg.mxu0
    %227 = vst [vmem:[#allocation7] sm:$0xff] %v149
    %228 = vst [vmem:[#allocation7 + $0x8] sm:$0xff] %v154
    %229 = vst [vmem:[#allocation7 + $0x10] sm:$0xff] %v159
    %230 = vst [vmem:[#allocation7 + $0x18] sm:$0xff] %v164
    %231 = vst [vmem:[#allocation7 + $0x20] sm:$0xff] %v169
    %232 = vst [vmem:[#allocation7 + $0x28] sm:$0xff] %v174
    %233 = vst [vmem:[#allocation7 + $0x30] sm:$0xff] %v179
    %234 = vst [vmem:[#allocation7 + $0x38] sm:$0xff] %v184
    %235 = vst [vmem:[#allocation7 + $0x40] sm:$0xff] %v189
    %236 = vst [vmem:[#allocation7 + $0x48] sm:$0xff] %v194
    %237 = vst [vmem:[#allocation7 + $0x50] sm:$0xff] %v199
    %238 = vst [vmem:[#allocation7 + $0x58] sm:$0xff] %v204
    %239 = vst [vmem:[#allocation7 + $0x60] sm:$0xff] %v209
    %240 = vst [vmem:[#allocation7 + $0x68] sm:$0xff] %v214
    %241 = vst [vmem:[#allocation7 + $0x70] sm:$0xff] %v219
    %242 = vst [vmem:[#allocation7 + $0x78] sm:$0xff] %v224
    // Predicated region
    $region22: #{tpu_custom_call.1} parent=1 // pred_check
      _
    $region23: #{tpu_custom_call.1} parent=1 // pred_check_branch
      %244 = sbr.rel (0) target = $region25
    $region24: #{tpu_custom_call.1} parent=1 // pred_region
      %s246 = ssub.s32 2048, 2048
      %247 = vsyncadd [#allocation4], %s246
      %s248 = sshll.u32 [#allocation7], 4
      %s249 = int_to_ptr.vmem [resolvable:$true] %s248
      %254 = dma.vmem_to_hbm [thread:$0]  %s249, 2048, %s3, [#allocation4], 128, 128, 8
    $region25: #{tpu_custom_call.1} parent=1 // pred_fallthru
      _
    // Predicated region
    $region26: #{tpu_custom_call.1} parent=1 // pred_check
      _
    $region27: #{tpu_custom_call.1} parent=1 // pred_check_branch
      %256 = sbr.rel (0) target = $region29
    $region28: #{tpu_custom_call.1} parent=1 // pred_region
      %257 = dma.done [#allocation4], 2048
    $region29: #{tpu_custom_call.1} parent=1 // pred_fallthru
      _
    %258 = vsyncpa [#allocation3], 1
    %259 = vsyncpa [#allocation6], 1
    %260 = vsyncpa [#allocation4], 1

</llo_original>
